<compile_context>
chip_gen: v7x
topology: tpu7x:2x2x1
jax: 0.10.0
libtpu: 0.0.40
codegen_flags: <defaults>
</compile_context>

<pallas_src>
import functools

import jax
import jax.numpy as jnp
from jax import lax
from jax.experimental import pallas as pl
from jax.experimental.pallas import tpu as pltpu


_ROLL_IS_NUMPY_CONV = None


def _roll_is_numpy_convention():
    """One-time probe of the pltpu.roll sign convention.

    numpy convention: roll(x, s)[i] == x[i - s] (shift toward higher indices).
    The FAM kernel only needs the sign, so detect it once with a tiny kernel
    (defensive; costs one trivial compile, cached for the process lifetime).
    """
    global _ROLL_IS_NUMPY_CONV
    if _ROLL_IS_NUMPY_CONV is None:
        def probe(x_ref, o_ref):
            o_ref[...] = pltpu.roll(x_ref[...], shift=1, axis=1)

        x = lax.broadcasted_iota(jnp.float32, (8, 128), 1)
        y = pl.pallas_call(
            probe, out_shape=jax.ShapeDtypeStruct((8, 128), jnp.float32))(x)
        _ROLL_IS_NUMPY_CONV = bool(float(y[0, 1]) == 0.0)
    return _ROLL_IS_NUMPY_CONV


def fam_kernel(x_ref, w_ref, b_ref, m_ref, o_ref, col_ref, *, W, np_roll):
    # x_ref  : (B, Cp, HW)        B images, Cp (8-aligned) channels, HW on lanes
    # w_ref  : (2*Cp, 9*Cp)       fused [conv3 ; conv1] weight matrix (resident)
    # b_ref  : (2*Cp, 1)  f32     fused biases (resident)
    # m_ref  : (9*Cp, HW)         per-tap 0/1 edge masks (resident)
    # o_ref  : (B, Cp, HW)        output block
    # col_ref: (9*Cp, B*HW)       im2col slab (VMEM scratch, persists across steps)
    B, Cp, HW = x_ref.shape

    # --- build the im2col slab: 9 rolled + masked taps per folded image -------
    for b in range(B):
        xi = x_ref[b]                                        # (Cp, HW)
        t = 0
        for dy in (-1, 0, 1):
            for dx in (-1, 0, 1):
                d = dy * W + dx                              # flat source offset
                if d == 0:
                    tap = xi                                 # center tap, no mask
                else:
                    # want tap[i] = x[i + d]
                    shift = (-d) % HW if np_roll else d % HW
                    tap = pltpu.roll(xi, shift=shift, axis=1)      # XLU lane rotate
                    tap = tap * m_ref[t * Cp:(t + 1) * Cp, :]      # kill wrap-around
                # static 8-sublane / 128-lane aligned store (b*HW is a static
                # multiple of 128, so no pl.multiple_of hint is needed)
                col_ref[t * Cp:(t + 1) * Cp, b * HW:(b + 1) * HW] = tap
                t += 1

    # --- single fused MXU matmul over all folded images, f32 accumulation -----
    y = jnp.dot(w_ref[...], col_ref[...], preferred_element_type=jnp.float32)

    # --- f32 epilogue: bias + ReLU on both conv outputs, then the add ---------
    y = jnp.maximum(y + b_ref[...], 0.0)                     # (2*Cp, B*HW)
    out = y[:Cp, :] + y[Cp:, :]                              # 8-aligned slice-add

    for b in range(B):
        o_ref[b] = out[:, b * HW:(b + 1) * HW].astype(o_ref.dtype)


def _pick_batch_fold(N, HW, max_lanes=4096):
    """Largest divisor B of N with B*HW <= max_lanes, keeping >= 2 grid steps
    when N >= 2 (so both v7x TensorCores get work)."""
    best = 1
    for b in range(1, N + 1):
        if N % b:
            continue
        if b * HW > max_lanes:
            continue
        if N >= 2 and N // b < 2:
            continue
        best = b
    return best


def fam_block(x_nchw, w3, b3, w1, b1, *, compute_dtype=None):
    """FAMBlock forward.

    x_nchw: (N, C, H, W); w3: (3, 3, Cin, Cout) HWIO; b3: (C,);
    w1: (Cin, Cout); b1: (C,).  Returns (N, C, H, W) in x_nchw.dtype.
    compute_dtype: dtype of the im2col slab / weights / MXU matmul (pass
    jnp.bfloat16 for the native bf16 MXU path); accumulation and the
    bias/ReLU/add epilogue are always f32.
    """
    N, C, H, W = x_nchw.shape
    HW = H * W
    # NOTE: for H*W not a multiple of 128, pad the flattened spatial axis in the
    # wrapper and zero the pad tail in the tap masks (not needed for 16x16).
    assert HW % 128 == 0, "flattened spatial axis must be a multiple of 128"
    if compute_dtype is None:
        compute_dtype = x_nchw.dtype
    Cp = ((C + 7) // 8) * 8                    # 8-sublane alignment
    B = _pick_batch_fold(N, HW)
    np_roll = _roll_is_numpy_convention()

    # ---- input: channel-padded, spatially flattened, cast to compute dtype ---
    x = x_nchw.reshape(N, C, HW)
    if Cp != C:
        x = jnp.pad(x, ((0, 0), (0, Cp - C), (0, 0)))
    x = x.astype(compute_dtype)

    # ---- fused weight matrix (2*Cp, 9*Cp) and f32 bias (2*Cp, 1) -------------
    #   rows [0:C]     -> conv3 output channels (all 9 taps)
    #   rows [Cp:Cp+C] -> conv1 output channels (center tap only)
    #   padded rows / columns -> zero
    w3_t = jnp.transpose(w3, (3, 0, 1, 2)).reshape(C, 9, C)      # (co, tap, ci)
    w_full = jnp.zeros((2 * Cp, 9, Cp), jnp.float32)
    w_full = w_full.at[:C, :, :C].set(w3_t.astype(jnp.float32))
    w_full = w_full.at[Cp:Cp + C, 4, :C].set(w1.T.astype(jnp.float32))
    w_full = w_full.reshape(2 * Cp, 9 * Cp).astype(compute_dtype)

    b_full = jnp.zeros((2 * Cp, 1), jnp.float32)
    b_full = b_full.at[:C, 0].set(b3.astype(jnp.float32))
    b_full = b_full.at[Cp:Cp + C, 0].set(b1.astype(jnp.float32))

    # ---- grid-invariant per-tap edge masks (resident input, no per-step work) -
    idx = jnp.arange(HW, dtype=jnp.int32)
    row, col = idx // W, idx % W
    taps = []
    for dy in (-1, 0, 1):
        for dx in (-1, 0, 1):
            m = jnp.ones((HW,), jnp.bool_)
            if dy == -1:
                m = m & (row > 0)
            if dy == 1:
                m = m & (row < H - 1)
            if dx == -1:
                m = m & (col > 0)
            if dx == 1:
                m = m & (col < W - 1)
            taps.append(m)
    mask = jnp.stack(taps, axis=0).astype(compute_dtype)          # (9, HW)
    mask = jnp.broadcast_to(mask[:, None, :], (9, Cp, HW)).reshape(9 * Cp, HW)

    kernel = functools.partial(fam_kernel, W=W, np_roll=np_roll)

    itemsize = jnp.dtype(compute_dtype).itemsize
    cost = pl.CostEstimate(
        flops=2 * (2 * Cp) * (9 * Cp) * (N * HW),
        transcendentals=0,
        bytes_accessed=(N * Cp * HW * (itemsize + x_nchw.dtype.itemsize)
                        + (2 * Cp) * (9 * Cp) * itemsize
                        + 9 * Cp * HW * itemsize
                        + 2 * Cp * 4),
    )

    # VMEM per step (double-buffered in/out blocks + resident slab/weights) is
    # tiny here; for large C*H*W budget against v7x's 64 MiB (add an HW-tiling
    # grid axis or use the bf16 path before raising vmem_limit_bytes).
    out = pl.pallas_call(
        kernel,
        out_shape=jax.ShapeDtypeStruct((N, Cp, HW), x_nchw.dtype),
        grid_spec=pltpu.PrefetchScalarGridSpec(
            num_scalar_prefetch=0,
            grid=(N // B,),
            in_specs=[
                pl.BlockSpec((B, Cp, HW), lambda n: (n, 0, 0)),
                pl.BlockSpec((2 * Cp, 9 * Cp), lambda n: (0, 0)),
                pl.BlockSpec((2 * Cp, 1), lambda n: (0, 0)),
                pl.BlockSpec((9 * Cp, HW), lambda n: (0, 0)),
            ],
            out_specs=pl.BlockSpec((B, Cp, HW), lambda n: (n, 0, 0)),
            scratch_shapes=[
                pltpu.VMEM((9 * Cp, B * HW), compute_dtype),   # im2col slab
            ],
        ),
        compiler_params=pltpu.CompilerParams(
            dimension_semantics=("parallel",)),
        cost_estimate=cost,
    )(x, w_full, b_full, mask)

    return out[:, :C, :].reshape(N, C, H, W)


def fam_block_reference(x_nchw, w3, b3, w1, b1):
    """Pure-JAX reference (NHWC convs) for correctness checking."""
    x = jnp.transpose(x_nchw, (0, 2, 3, 1))
    dn = lax.conv_dimension_numbers(x.shape, w3.shape, ("NHWC", "HWIO", "NHWC"))
    y3 = lax.conv_general_dilated(x, w3, (1, 1), "SAME", dimension_numbers=dn)
    y3 = jnp.maximum(y3 + b3, 0.0)
    y1 = jnp.einsum("nhwc,co->nhwo", x, w1) + b1
    y1 = jnp.maximum(y1, 0.0)
    return jnp.transpose(y3 + y1, (0, 3, 1, 2))


if __name__ == "__main__":
    key = jax.random.PRNGKey(0)
    N, C, H, W = 2, 4, 16, 16

    k_x, k_w3, k_b3, k_w1, k_b1 = jax.random.split(key, 5)
    x = jax.random.normal(k_x, (N, C, H, W), jnp.float32)

    # Parameters matching nn.Conv2d(channels, channels, k):
    # w3 stored HWIO (3, 3, C_in, C_out); w1 stored (C_in, C_out).
    w3 = jax.random.normal(k_w3, (3, 3, C, C), jnp.float32) * 0.1
    b3 = jax.random.normal(k_b3, (C,), jnp.float32) * 0.1
    w1 = jax.random.normal(k_w1, (C, C), jnp.float32) * 0.1
    b1 = jax.random.normal(k_b1, (C,), jnp.float32) * 0.1

    ref = jax.block_until_ready(fam_block_reference(x, w3, b3, w1, b1))

    # f32 MXU path: tight check against the f32 reference.
    out = jax.block_until_ready(fam_block(x, w3, b3, w1, b1))
    assert out.shape == (N, C, H, W), out.shape
    assert jnp.allclose(out, ref, atol=1e-4, rtol=1e-4), "f32 mismatch vs reference"

    # bf16 MXU path (f32 accumulation + f32 epilogue): loose tolerance.
    out_bf16 = jax.block_until_ready(
        fam_block(x, w3, b3, w1, b1, compute_dtype=jnp.bfloat16))
    assert out_bf16.shape == (N, C, H, W), out_bf16.shape
    assert jnp.allclose(out_bf16, ref, atol=1e-1, rtol=1e-1), "bf16 mismatch vs reference"

    print("KERNEL_OK")
</pallas_src>

<mosaic_0001>
module attributes {stable_mosaic.version = 11 : i64} {
  func.func @probe(%arg0: memref<8x128xf32, #tpu.memory_space<vmem>>, %arg1: memref<8x128xf32, #tpu.memory_space<vmem>>) attributes {dimension_semantics = [], scalar_prefetch = 0 : i64, scratch_operands = 0 : i64, tpu.core_type = #tpu.core_type<tc>} {
    %c0 = arith.constant 0 : index
    %c0_0 = arith.constant 0 : index
    %0 = vector.load %arg0[%c0, %c0_0] : memref<8x128xf32, #tpu.memory_space<vmem>>, vector<8x128xf32>
    %c1_i32 = arith.constant 1 : i32
    %1 = tpu.dynamic_rotate %0 by %c1_i32 dim 1 : vector<8x128xf32>, i32 -> vector<8x128xf32>
    %c0_1 = arith.constant 0 : index
    %c0_2 = arith.constant 0 : index
    %2 = vector.load %arg1[%c0_1, %c0_2] : memref<8x128xf32, #tpu.memory_space<vmem>>, vector<8x128xf32>
    tpu.vector_store %arg1[%c0_1, %c0_2], %1 {strides = array<i32>} : memref<8x128xf32, #tpu.memory_space<vmem>>, vector<8x128xf32>,
    return
  }
}

</mosaic_0001>

<llo_original>
// kernel: tpu_custom_call.1
$region0: #{tpu_custom_call.1}
  #allocation0 [shape = 'u32[]', space=smem, size = 0x4, offset = 0x4, fixed_abs, tag = 'smem constant byte address 0x4 - core index']
  #allocation1 [shape = 'u32[144,128]{1,0:T(1,128)}', space=vmem, size = 0x12000, scoped, tag = 'internal scratch']
  %s0 = inlined_call_operand.hbm [shape: f32[8,128], index: 0, kind: input, shape index: {}]
  %s1 = inlined_call_operand.hbm [shape: f32[8,128], index: 1, kind: output, shape index: {}]
  %s2 = sld [smem:[#allocation0]]
  $region18: #{tpu_custom_call.1} parent=0
    _
  %s4 = ssub.s32 1, %s2
  %s5 = scalar_select 0, %s4, %s2
  $region1: #{tpu_custom_call.1} parent=0
    #allocation2 [shape = 'u8[4096]{0}', space=vmem, size = 0x1000, scoped, tag = 'input window, operand 0, single buffered']
    #allocation3 [shape = 's32[1]{0}', space=sflag, size = 0x4, scoped, tag = 'scoped memory for tpu_custom_call.1']
    #allocation4 [shape = 's32[1]{0}', space=sflag, size = 0x4, scoped, tag = 'scoped memory for tpu_custom_call.1']
    #allocation5 [shape = 'u8[4096]{0}', space=vmem, size = 0x1000, scoped, tag = 'output window, operand 0, single buffered']
    %6 = vsyncpa [#allocation3], 0
    %7 = vsyncpa [#allocation4], 0
    // Predicated region
    $region2: #{tpu_custom_call.1} parent=1 // pred_check
      _
    $region3: #{tpu_custom_call.1} parent=1 // pred_check_branch
      %9 = sbr.rel (0) target = $region5
    $region4: #{tpu_custom_call.1} parent=1 // pred_region
      %s11 = ssub.s32 128, 128
      %12 = vsyncadd [#allocation3], %s11
      %s14 = sshll.u32 [#allocation2], 4
      %s15 = int_to_ptr.vmem [resolvable:$true] %s14
      %17 = dma.hbm_to_vmem [thread:$0]  %s0, 128, %s15, [#allocation3]
    $region5: #{tpu_custom_call.1} parent=1 // pred_fallthru
      _
    // Predicated region
    $region6: #{tpu_custom_call.1} parent=1 // pred_check
      _
    $region7: #{tpu_custom_call.1} parent=1 // pred_check_branch
      %19 = sbr.rel (0) target = $region9
    $region8: #{tpu_custom_call.1} parent=1 // pred_region
      %20 = dma.done [#allocation3], 128
    $region9: #{tpu_custom_call.1} parent=1 // pred_fallthru
      _
    %v21 = vld [vmem:[#allocation2] sm:$0xff]
    %22 = vrot.lane.b32.xlu0 %v21, 1
    %v23 = vpop.permute.xlu0 %22
    %24 = vst [vmem:[#allocation5] sm:$0xff] %v23
    // Predicated region
    $region10: #{tpu_custom_call.1} parent=1 // pred_check
      _
    $region11: #{tpu_custom_call.1} parent=1 // pred_check_branch
      %26 = sbr.rel (0) target = $region13
    $region12: #{tpu_custom_call.1} parent=1 // pred_region
      %s28 = ssub.s32 128, 128
      %29 = vsyncadd [#allocation4], %s28
      %s31 = sshll.u32 [#allocation5], 4
      %s32 = int_to_ptr.vmem [resolvable:$true] %s31
      %34 = dma.vmem_to_hbm [thread:$0]  %s32, 128, %s1, [#allocation4]
    $region13: #{tpu_custom_call.1} parent=1 // pred_fallthru
      _
    // Predicated region
    $region14: #{tpu_custom_call.1} parent=1 // pred_check
      _
    $region15: #{tpu_custom_call.1} parent=1 // pred_check_branch
      %36 = sbr.rel (0) target = $region17
    $region16: #{tpu_custom_call.1} parent=1 // pred_region
      %37 = dma.done [#allocation4], 128
    $region17: #{tpu_custom_call.1} parent=1 // pred_fallthru
      _
    %38 = vsyncpa [#allocation3], 1
    %39 = vsyncpa [#allocation4], 1

</llo_original>
